<compile_context>
chip_gen: v6e
topology: v6e:2x2x1
jax: 0.10.0
libtpu: 0.0.40
codegen_flags: <defaults>
</compile_context>

<pallas_src>
import jax
import jax.numpy as jnp
from jax.experimental import pallas as pl
from jax.experimental.pallas import tpu as pltpu


def _round_up(x, m):
    return ((x + m - 1) // m) * m


def _global_agg_kernel(sv_ref, ev_ref, nv_ref, nw_ref,
                       t_ev_ref, w1bd_ref, w1b_ref, w2f_ref, eatt_ref,
                       w3a_ref, w3bf_ref, out_ref):
    f32 = jnp.float32
    sv = sv_ref[...].astype(f32)      # (tm, D)
    ev = ev_ref[...].astype(f32)      # (tm, D)
    nv = nv_ref[...].astype(f32)      # (tm, K*D)  lane-dense neighbor slab
    nw = nw_ref[...].astype(f32)      # (tm, K)

    # Replicate extra_vector across the K neighbor groups: (tm, D) -> (tm, K*D).
    # Done as a matmul with a constant 0/1 "tile" matrix so it stays on the
    # (otherwise idle) MXU and needs no in-kernel relayout.
    ev_rep = jnp.dot(ev, t_ev_ref[...], preferred_element_type=f32)      # (tm, K*D)

    # alpha_k = (extra * neighbor_k) @ w_1[:D]  +  weight_k * w_1[D]
    # realized as block-diag(w_1[:D]) (K*D, K*D) and a (K, K*D) fold of w_1[D].
    prod = ev_rep * nv                                                    # (tm, K*D)
    alpha = (jnp.dot(prod, w1bd_ref[...], preferred_element_type=f32) +
             jnp.dot(nw, w1b_ref[...], preferred_element_type=f32))       # (tm, K*D)
    # leaky_relu(alpha, negative_slope=0.2)
    alpha = jnp.where(alpha >= 0, alpha, 0.2 * alpha)

    # logits[:, k] = alpha_k . w_2   (per-neighbor reduce folded into one matmul)
    logits = jnp.dot(alpha, w2f_ref[...], preferred_element_type=f32)     # (tm, K)

    # softmax over the K neighbors (max-subtracted; EUP approx reciprocal)
    logits = logits - jnp.max(logits, axis=-1, keepdims=True)
    expv = jnp.exp(logits)
    attn = expv * pl.reciprocal(jnp.sum(expv, axis=-1, keepdims=True),
                                approx=True)                              # (tm, K)

    # cat([self, sum_k attn_k * neighbor_k], -1) @ w_3
    #   = self @ w_3[:D]  +  (attn_rep * nv) @ tile(w_3[D:], K)
    attn_rep = jnp.dot(attn, eatt_ref[...], preferred_element_type=f32)   # (tm, K*D)
    out = (jnp.dot(sv, w3a_ref[...], preferred_element_type=f32) +
           jnp.dot(attn_rep * nv, w3bf_ref[...], preferred_element_type=f32))

    # act = relu
    # TODO(synk): dropout is omitted (inference / training=False semantics).
    out_ref[...] = jnp.maximum(out, 0.0).astype(out_ref.dtype)


def global_aggregator_forward(self_vectors, neighbor_vector, neighbor_weight,
                              extra_vector, w_1, w_2, w_3, *, tm=4096):
    """Pallas implementation of GlobalAggregator.forward (extra_vector path)."""
    B, N, K, D = neighbor_vector.shape
    M = B * N
    KD = K * D
    wt = w_1.dtype

    # ---- lane-dense 2-D layouts (no 3-D blocks, no in-kernel reshapes) -----
    sv = self_vectors.reshape(M, D)
    ev = extra_vector.reshape(M, D)
    nv = neighbor_vector.reshape(M, KD)      # row-major identical bytes
    nw = neighbor_weight.reshape(M, K)

    # ---- row tile: large, multiple of 8, balanced across grid steps --------
    tm_req = max(8, _round_up(int(tm), 8))
    tm_eff = min(tm_req, _round_up(M, 8))
    num_tiles = -(-M // tm_eff)
    tm_eff = _round_up(-(-M // num_tiles), 8)   # rebalance to limit pad waste
    M_pad = num_tiles * tm_eff
    if M_pad != M:
        pad = M_pad - M
        sv = jnp.pad(sv, ((0, pad), (0, 0)))
        ev = jnp.pad(ev, ((0, pad), (0, 0)))
        nv = jnp.pad(nv, ((0, pad), (0, 0)))
        nw = jnp.pad(nw, ((0, pad), (0, 0)))

    # ---- split / fold the concatenation-structured weights (built once) ----
    w1a = w_1[:D, :]                    # (D, D)   acts on extra*neighbor
    w1b_row = w_1[D:, :]                # (1, D)   acts on appended neighbor_weight
    w3a = w_3[:D, :]                    # (D, D)   acts on self_vectors
    w3b = w_3[D:, :]                    # (D, D)   acts on aggregated neighbors

    eyeK = jnp.eye(K, dtype=wt)
    t_ev = jnp.kron(jnp.ones((1, K), wt), jnp.eye(D, dtype=wt))   # (D, K*D)
    w1_bd = jnp.kron(eyeK, w1a)                                   # (K*D, K*D)
    w1b_bd = jnp.kron(eyeK, w1b_row)                              # (K, K*D)
    w2_fold = jnp.kron(eyeK, w_2)                                 # (K*D, K)
    e_att = jnp.kron(eyeK, jnp.ones((1, D), wt))                  # (K, K*D)
    w3b_fold = jnp.tile(w3b, (K, 1))                              # (K*D, D)

    grid = (M_pad // tm_eff,)
    out = pl.pallas_call(
        _global_agg_kernel,
        out_shape=jax.ShapeDtypeStruct((M_pad, D), self_vectors.dtype),
        grid_spec=pltpu.PrefetchScalarGridSpec(
            num_scalar_prefetch=0,
            grid=grid,
            in_specs=[
                pl.BlockSpec((tm_eff, D), lambda i: (i, 0)),    # self_vectors
                pl.BlockSpec((tm_eff, D), lambda i: (i, 0)),    # extra_vector
                pl.BlockSpec((tm_eff, KD), lambda i: (i, 0)),   # neighbor_vector
                pl.BlockSpec((tm_eff, K), lambda i: (i, 0)),    # neighbor_weight
                pl.BlockSpec((D, KD), lambda i: (0, 0)),        # t_ev
                pl.BlockSpec((KD, KD), lambda i: (0, 0)),       # w1_bd
                pl.BlockSpec((K, KD), lambda i: (0, 0)),        # w1b_bd
                pl.BlockSpec((KD, K), lambda i: (0, 0)),        # w2_fold
                pl.BlockSpec((K, KD), lambda i: (0, 0)),        # e_att
                pl.BlockSpec((D, D), lambda i: (0, 0)),         # w3a
                pl.BlockSpec((KD, D), lambda i: (0, 0)),        # w3b_fold
            ],
            out_specs=pl.BlockSpec((tm_eff, D), lambda i: (i, 0)),
        ),
        compiler_params=pltpu.CompilerParams(
            dimension_semantics=("parallel",),      # shards across v7x's 2 TCs
            vmem_limit_bytes=32 * 1024 * 1024),     # safe on v5e/v6e/v7x
    )(sv, ev, nv, nw, t_ev, w1_bd, w1b_bd, w2_fold, e_att, w3a, w3b_fold)

    return out[:M].reshape(B, N, D)


def _reference_forward(self_vectors, neighbor_vector, neighbor_weight,
                       extra_vector, w_1, w_2, w_3):
    """Pure-JAX reference mirroring the PyTorch forward (eval mode)."""
    B, N, K, D = neighbor_vector.shape
    ev = jnp.repeat(extra_vector[:, :, None, :], K, axis=2)
    cat = jnp.concatenate([ev * neighbor_vector,
                           neighbor_weight[..., None]], axis=-1)
    alpha = jnp.matmul(cat, w_1)
    alpha = jnp.where(alpha >= 0, alpha, 0.2 * alpha)
    alpha = jnp.matmul(alpha, w_2)[..., 0]
    alpha = jax.nn.softmax(alpha, axis=-1)[..., None]
    agg = jnp.sum(alpha * neighbor_vector, axis=-2)
    out = jnp.concatenate([self_vectors, agg], axis=-1)
    out = jnp.matmul(out, w_3)
    return jnp.maximum(out.reshape(B, N, D), 0.0)


if __name__ == "__main__":
    B, N, K, D = 2, 8, 4, 32   # batch, nodes-per-session, neighbors, hidden dim

    key = jax.random.PRNGKey(0)
    ks = jax.random.split(key, 8)

    # deterministic "checkpoint-free" parameter init (uniform, like reset_parameters)
    stdv = 1.0 / jnp.sqrt(D)
    w_1 = jax.random.uniform(ks[0], (D + 1, D), jnp.float32, -stdv, stdv)
    w_2 = jax.random.uniform(ks[1], (D, 1), jnp.float32, -stdv, stdv)
    w_3 = jax.random.uniform(ks[2], (2 * D, D), jnp.float32, -stdv, stdv)
    # (self.bias is declared in the module but never used in forward)

    self_vectors    = jax.random.normal(ks[3], (B, N, D), jnp.float32)
    neighbor_vector = jax.random.normal(ks[4], (B, N, K, D), jnp.float32)
    neighbor_weight = jax.random.normal(ks[5], (B, N, K), jnp.float32)
    extra_vector    = jax.random.normal(ks[6], (B, N, D), jnp.float32)

    out = global_aggregator_forward(self_vectors, neighbor_vector,
                                    neighbor_weight, extra_vector,
                                    w_1, w_2, w_3)
    out = jax.block_until_ready(out)

    ref = _reference_forward(self_vectors, neighbor_vector, neighbor_weight,
                             extra_vector, w_1, w_2, w_3)
    assert out.shape == (B, N, D)
    # Tolerance relaxed (per review) because the softmax normalizer now uses
    # the EUP approximate reciprocal (pl.reciprocal(..., approx=True)).
    assert jnp.allclose(out, ref, atol=2e-2, rtol=2e-2), "mismatch vs reference"

    print("KERNEL_OK")
</pallas_src>

<mosaic_0001>
module attributes {stable_mosaic.version = 11 : i64} {
  func.func @_global_agg_kernel(%arg0: i32, %arg1: memref<16x32xf32, #tpu.memory_space<vmem>>, %arg2: memref<16x32xf32, #tpu.memory_space<vmem>>, %arg3: memref<16x128xf32, #tpu.memory_space<vmem>>, %arg4: memref<16x4xf32, #tpu.memory_space<vmem>>, %arg5: memref<32x128xf32, #tpu.memory_space<vmem>>, %arg6: memref<128x128xf32, #tpu.memory_space<vmem>>, %arg7: memref<4x128xf32, #tpu.memory_space<vmem>>, %arg8: memref<128x4xf32, #tpu.memory_space<vmem>>, %arg9: memref<4x128xf32, #tpu.memory_space<vmem>>, %arg10: memref<32x32xf32, #tpu.memory_space<vmem>>, %arg11: memref<128x32xf32, #tpu.memory_space<vmem>>, %arg12: memref<16x32xf32, #tpu.memory_space<vmem>>) attributes {dimension_semantics = [#tpu.dimension_semantics<parallel>], iteration_bounds = array<i64: 1>, scalar_prefetch = 0 : i64, scratch_operands = 0 : i64, tpu.core_type = #tpu.core_type<tc>, window_params = [{transform_indices = @transform_0, window_bounds = array<i64: 16, 32>}, {transform_indices = @transform_1, window_bounds = array<i64: 16, 32>}, {transform_indices = @transform_2, window_bounds = array<i64: 16, 128>}, {transform_indices = @transform_3, window_bounds = array<i64: 16, 4>}, {pipeline_mode = #tpu.pipeline_mode<synchronous>, transform_indices = @transform_4, window_bounds = array<i64: 32, 128>}, {pipeline_mode = #tpu.pipeline_mode<synchronous>, transform_indices = @transform_5, window_bounds = array<i64: 128, 128>}, {pipeline_mode = #tpu.pipeline_mode<synchronous>, transform_indices = @transform_6, window_bounds = array<i64: 4, 128>}, {pipeline_mode = #tpu.pipeline_mode<synchronous>, transform_indices = @transform_7, window_bounds = array<i64: 128, 4>}, {pipeline_mode = #tpu.pipeline_mode<synchronous>, transform_indices = @transform_8, window_bounds = array<i64: 4, 128>}, {pipeline_mode = #tpu.pipeline_mode<synchronous>, transform_indices = @transform_9, window_bounds = array<i64: 32, 32>}, {pipeline_mode = #tpu.pipeline_mode<synchronous>, transform_indices = @transform_10, window_bounds = array<i64: 128, 32>}, {transform_indices = @transform_11, window_bounds = array<i64: 16, 32>}]} {
    %c0 = arith.constant 0 : index
    %c0_0 = arith.constant 0 : index
    %0 = vector.load %arg1[%c0, %c0_0] : memref<16x32xf32, #tpu.memory_space<vmem>>, vector<16x32xf32>
    %c0_1 = arith.constant 0 : index
    %c0_2 = arith.constant 0 : index
    %1 = vector.load %arg2[%c0_1, %c0_2] : memref<16x32xf32, #tpu.memory_space<vmem>>, vector<16x32xf32>
    %c0_3 = arith.constant 0 : index
    %c0_4 = arith.constant 0 : index
    %2 = vector.load %arg3[%c0_3, %c0_4] : memref<16x128xf32, #tpu.memory_space<vmem>>, vector<16x128xf32>
    %c0_5 = arith.constant 0 : index
    %c0_6 = arith.constant 0 : index
    %3 = vector.load %arg4[%c0_5, %c0_6] : memref<16x4xf32, #tpu.memory_space<vmem>>, vector<16x4xf32>
    %c0_7 = arith.constant 0 : index
    %c0_8 = arith.constant 0 : index
    %4 = vector.load %arg5[%c0_7, %c0_8] : memref<32x128xf32, #tpu.memory_space<vmem>>, vector<32x128xf32>
    %cst = arith.constant dense<0.000000e+00> : vector<16x128xf32>
    %5 = tpu.matmul %1, %4, %cst {dimension_numbers = #tpu.dot_dimension_numbers<[1], [0], [0], [1], [0, 0, 1, 1], [], []>} : vector<16x32xf32>, vector<32x128xf32>, vector<16x128xf32> -> vector<16x128xf32>
    %6 = arith.mulf %5, %2 : vector<16x128xf32>
    %c0_9 = arith.constant 0 : index
    %c0_10 = arith.constant 0 : index
    %7 = vector.load %arg6[%c0_9, %c0_10] : memref<128x128xf32, #tpu.memory_space<vmem>>, vector<128x128xf32>
    %cst_11 = arith.constant dense<0.000000e+00> : vector<16x128xf32>
    %8 = tpu.matmul %6, %7, %cst_11 {dimension_numbers = #tpu.dot_dimension_numbers<[1], [0], [0], [1], [0, 0, 1, 1], [], []>} : vector<16x128xf32>, vector<128x128xf32>, vector<16x128xf32> -> vector<16x128xf32>
    %c0_12 = arith.constant 0 : index
    %c0_13 = arith.constant 0 : index
    %9 = vector.load %arg7[%c0_12, %c0_13] : memref<4x128xf32, #tpu.memory_space<vmem>>, vector<4x128xf32>
    %cst_14 = arith.constant dense<0.000000e+00> : vector<16x128xf32>
    %10 = tpu.matmul %3, %9, %cst_14 {dimension_numbers = #tpu.dot_dimension_numbers<[1], [0], [0], [1], [0, 0, 1, 1], [], []>} : vector<16x4xf32>, vector<4x128xf32>, vector<16x128xf32> -> vector<16x128xf32>
    %11 = arith.addf %8, %10 : vector<16x128xf32>
    %cst_15 = arith.constant 0.000000e+00 : f32
    %12 = vector.broadcast %cst_15 : f32 to vector<16x128xf32>
    %13 = arith.cmpf oge, %11, %12 : vector<16x128xf32>
    %cst_16 = arith.constant 2.000000e-01 : f32
    %14 = vector.broadcast %cst_16 : f32 to vector<16x128xf32>
    %15 = arith.mulf %14, %11 : vector<16x128xf32>
    %16 = arith.select %13, %11, %15 : vector<16x128xi1>, vector<16x128xf32>
    %c0_17 = arith.constant 0 : index
    %c0_18 = arith.constant 0 : index
    %17 = vector.load %arg8[%c0_17, %c0_18] : memref<128x4xf32, #tpu.memory_space<vmem>>, vector<128x4xf32>
    %cst_19 = arith.constant dense<0.000000e+00> : vector<16x4xf32>
    %18 = tpu.matmul %16, %17, %cst_19 {dimension_numbers = #tpu.dot_dimension_numbers<[1], [0], [0], [1], [0, 0, 1, 1], [], []>} : vector<16x128xf32>, vector<128x4xf32>, vector<16x4xf32> -> vector<16x4xf32>
    %cst_20 = arith.constant dense<0xFF800000> : vector<16xf32>
    %19 = vector.multi_reduction <maximumf>, %18, %cst_20 [1] : vector<16x4xf32> to vector<16xf32>
    %20 = vector.shape_cast %19 : vector<16xf32> to vector<16x1xf32>
    %21 = vector.broadcast %20 : vector<16x1xf32> to vector<16x4xf32>
    %22 = arith.subf %18, %21 : vector<16x4xf32>
    %23 = math.exp %22 : vector<16x4xf32>
    %cst_21 = arith.constant dense<0.000000e+00> : vector<16xf32>
    %24 = vector.multi_reduction <add>, %23, %cst_21 [1] : vector<16x4xf32> to vector<16xf32>
    %25 = vector.shape_cast %24 : vector<16xf32> to vector<16x1xf32>
    %26 = tpu.reciprocal %25 {approx = true} : vector<16x1xf32> -> vector<16x1xf32>
    %27 = vector.broadcast %26 : vector<16x1xf32> to vector<16x4xf32>
    %28 = arith.mulf %23, %27 : vector<16x4xf32>
    %c0_22 = arith.constant 0 : index
    %c0_23 = arith.constant 0 : index
    %29 = vector.load %arg9[%c0_22, %c0_23] : memref<4x128xf32, #tpu.memory_space<vmem>>, vector<4x128xf32>
    %cst_24 = arith.constant dense<0.000000e+00> : vector<16x128xf32>
    %30 = tpu.matmul %28, %29, %cst_24 {dimension_numbers = #tpu.dot_dimension_numbers<[1], [0], [0], [1], [0, 0, 1, 1], [], []>} : vector<16x4xf32>, vector<4x128xf32>, vector<16x128xf32> -> vector<16x128xf32>
    %c0_25 = arith.constant 0 : index
    %c0_26 = arith.constant 0 : index
    %31 = vector.load %arg10[%c0_25, %c0_26] : memref<32x32xf32, #tpu.memory_space<vmem>>, vector<32x32xf32>
    %cst_27 = arith.constant dense<0.000000e+00> : vector<16x32xf32>
    %32 = tpu.matmul %0, %31, %cst_27 {dimension_numbers = #tpu.dot_dimension_numbers<[1], [0], [0], [1], [0, 0, 1, 1], [], []>} : vector<16x32xf32>, vector<32x32xf32>, vector<16x32xf32> -> vector<16x32xf32>
    %33 = arith.mulf %30, %2 : vector<16x128xf32>
    %c0_28 = arith.constant 0 : index
    %c0_29 = arith.constant 0 : index
    %34 = vector.load %arg11[%c0_28, %c0_29] : memref<128x32xf32, #tpu.memory_space<vmem>>, vector<128x32xf32>
    %cst_30 = arith.constant dense<0.000000e+00> : vector<16x32xf32>
    %35 = tpu.matmul %33, %34, %cst_30 {dimension_numbers = #tpu.dot_dimension_numbers<[1], [0], [0], [1], [0, 0, 1, 1], [], []>} : vector<16x128xf32>, vector<128x32xf32>, vector<16x32xf32> -> vector<16x32xf32>
    %36 = arith.addf %32, %35 : vector<16x32xf32>
    %cst_31 = arith.constant 0.000000e+00 : f32
    %37 = vector.broadcast %cst_31 : f32 to vector<16x32xf32>
    %38 = arith.maximumf %36, %37 : vector<16x32xf32>
    %c0_32 = arith.constant 0 : index
    %c0_33 = arith.constant 0 : index
    %39 = vector.load %arg12[%c0_32, %c0_33] : memref<16x32xf32, #tpu.memory_space<vmem>>, vector<16x32xf32>
    tpu.vector_store %arg12[%c0_32, %c0_33], %38 {strides = array<i32>} : memref<16x32xf32, #tpu.memory_space<vmem>>, vector<16x32xf32>,
    return
  }
  func.func @transform_0(%arg0: i32) -> (i32, i32) {
    %c0_i32 = arith.constant 0 : i32
    %c0_i32_0 = arith.constant 0 : i32
    return %arg0, %c0_i32 : i32, i32
  }
  func.func @transform_1(%arg0: i32) -> (i32, i32) {
    %c0_i32 = arith.constant 0 : i32
    %c0_i32_0 = arith.constant 0 : i32
    return %arg0, %c0_i32 : i32, i32
  }
  func.func @transform_2(%arg0: i32) -> (i32, i32) {
    %c0_i32 = arith.constant 0 : i32
    %c0_i32_0 = arith.constant 0 : i32
    return %arg0, %c0_i32 : i32, i32
  }
  func.func @transform_3(%arg0: i32) -> (i32, i32) {
    %c0_i32 = arith.constant 0 : i32
    %c0_i32_0 = arith.constant 0 : i32
    return %arg0, %c0_i32 : i32, i32
  }
  func.func @transform_4(%arg0: i32) -> (i32, i32) {
    %c0_i32 = arith.constant 0 : i32
    %c0_i32_0 = arith.constant 0 : i32
    %c0_i32_1 = arith.constant 0 : i32
    return %c0_i32, %c0_i32_0 : i32, i32
  }
  func.func @transform_5(%arg0: i32) -> (i32, i32) {
    %c0_i32 = arith.constant 0 : i32
    %c0_i32_0 = arith.constant 0 : i32
    %c0_i32_1 = arith.constant 0 : i32
    return %c0_i32, %c0_i32_0 : i32, i32
  }
  func.func @transform_6(%arg0: i32) -> (i32, i32) {
    %c0_i32 = arith.constant 0 : i32
    %c0_i32_0 = arith.constant 0 : i32
    %c0_i32_1 = arith.constant 0 : i32
    return %c0_i32, %c0_i32_0 : i32, i32
  }
  func.func @transform_7(%arg0: i32) -> (i32, i32) {
    %c0_i32 = arith.constant 0 : i32
    %c0_i32_0 = arith.constant 0 : i32
    %c0_i32_1 = arith.constant 0 : i32
    return %c0_i32, %c0_i32_0 : i32, i32
  }
  func.func @transform_8(%arg0: i32) -> (i32, i32) {
    %c0_i32 = arith.constant 0 : i32
    %c0_i32_0 = arith.constant 0 : i32
    %c0_i32_1 = arith.constant 0 : i32
    return %c0_i32, %c0_i32_0 : i32, i32
  }
  func.func @transform_9(%arg0: i32) -> (i32, i32) {
    %c0_i32 = arith.constant 0 : i32
    %c0_i32_0 = arith.constant 0 : i32
    %c0_i32_1 = arith.constant 0 : i32
    return %c0_i32, %c0_i32_0 : i32, i32
  }
  func.func @transform_10(%arg0: i32) -> (i32, i32) {
    %c0_i32 = arith.constant 0 : i32
    %c0_i32_0 = arith.constant 0 : i32
    %c0_i32_1 = arith.constant 0 : i32
    return %c0_i32, %c0_i32_0 : i32, i32
  }
  func.func @transform_11(%arg0: i32) -> (i32, i32) {
    %c0_i32 = arith.constant 0 : i32
    %c0_i32_0 = arith.constant 0 : i32
    return %arg0, %c0_i32 : i32, i32
  }
}

</mosaic_0001>

<llo_original>
// kernel: tpu_custom_call.1
$region0: #{tpu_custom_call.1}
  #allocation0 [shape = 'u32[]', space=smem, size = 0x4, offset = 0x4, fixed_abs, tag = 'smem constant byte address 0x4 - core index']
  #allocation1 [shape = 'u32[144,128]{1,0:T(1,128)}', space=vmem, size = 0x12000, scoped, tag = 'internal scratch']
  %s0 = inlined_call_operand.vmem [shape: f32[16,32], index: 0, kind: input, shape index: {}]
  %s1 = inlined_call_operand.vmem [shape: f32[16,32], index: 1, kind: input, shape index: {}]
  %s2 = inlined_call_operand.vmem [shape: f32[16,128], index: 2, kind: input, shape index: {}]
  %s3 = inlined_call_operand.vmem [shape: f32[16,4], index: 3, kind: input, shape index: {}]
  %s4 = inlined_call_operand.vmem [shape: f32[32,128], index: 4, kind: input, shape index: {}]
  %s5 = inlined_call_operand.vmem [shape: f32[128,128], index: 5, kind: input, shape index: {}]
  %s6 = inlined_call_operand.vmem [shape: f32[4,128], index: 6, kind: input, shape index: {}]
  %s7 = inlined_call_operand.vmem [shape: f32[128,4], index: 7, kind: input, shape index: {}]
  %s8 = inlined_call_operand.vmem [shape: f32[4,128], index: 8, kind: input, shape index: {}]
  %s9 = inlined_call_operand.vmem [shape: f32[32,32], index: 9, kind: input, shape index: {}]
  %s10 = inlined_call_operand.vmem [shape: f32[128,32], index: 10, kind: input, shape index: {}]
  %s11 = inlined_call_operand.hbm [shape: f32[16,32], index: 11, kind: output, shape index: {}]
  %s12 = sld [smem:[#allocation0]]
  $region54: #{tpu_custom_call.1} parent=0
    _
  %s14 = ssub.s32 1, %s12
  %s15 = scalar_select 0, %s14, %s12
  $region1: #{tpu_custom_call.1} parent=0
    #allocation2 [shape = 'u8[8192]{0}', space=vmem, size = 0x2000, scoped, tag = 'output window, operand 0, single buffered']
    #allocation3 [shape = 's32[1]{0}', space=sflag, size = 0x4, scoped, tag = 'scoped memory for tpu_custom_call.1']
    %16 = vsyncpa [#allocation3], 0
    // Predicated region
    $region2: #{tpu_custom_call.1} parent=1 // pred_check
      _
    $region3: #{tpu_custom_call.1} parent=1 // pred_check_branch
      %18 = sbr.rel (0) target = $region5
    $region4: #{tpu_custom_call.1} parent=1 // pred_region
      _
    $region5: #{tpu_custom_call.1} parent=1 // pred_fallthru
      _
    // Predicated region
    $region6: #{tpu_custom_call.1} parent=1 // pred_check
      _
    $region7: #{tpu_custom_call.1} parent=1 // pred_check_branch
      %20 = sbr.rel (0) target = $region9
    $region8: #{tpu_custom_call.1} parent=1 // pred_region
      _
    $region9: #{tpu_custom_call.1} parent=1 // pred_fallthru
      _
    // Predicated region
    $region10: #{tpu_custom_call.1} parent=1 // pred_check
      _
    $region11: #{tpu_custom_call.1} parent=1 // pred_check_branch
      %22 = sbr.rel (0) target = $region13
    $region12: #{tpu_custom_call.1} parent=1 // pred_region
      _
    $region13: #{tpu_custom_call.1} parent=1 // pred_fallthru
      _
    // Predicated region
    $region14: #{tpu_custom_call.1} parent=1 // pred_check
      _
    $region15: #{tpu_custom_call.1} parent=1 // pred_check_branch
      %24 = sbr.rel (0) target = $region17
    $region16: #{tpu_custom_call.1} parent=1 // pred_region
      _
    $region17: #{tpu_custom_call.1} parent=1 // pred_fallthru
      _
    // Predicated region
    $region18: #{tpu_custom_call.1} parent=1 // pred_check
      _
    $region19: #{tpu_custom_call.1} parent=1 // pred_check_branch
      %26 = sbr.rel (0) target = $region21
    $region20: #{tpu_custom_call.1} parent=1 // pred_region
      _
    $region21: #{tpu_custom_call.1} parent=1 // pred_fallthru
      _
    // Predicated region
    $region22: #{tpu_custom_call.1} parent=1 // pred_check
      _
    $region23: #{tpu_custom_call.1} parent=1 // pred_check_branch
      %28 = sbr.rel (0) target = $region25
    $region24: #{tpu_custom_call.1} parent=1 // pred_region
      _
    $region25: #{tpu_custom_call.1} parent=1 // pred_fallthru
      _
    // Predicated region
    $region26: #{tpu_custom_call.1} parent=1 // pred_check
      _
    $region27: #{tpu_custom_call.1} parent=1 // pred_check_branch
      %30 = sbr.rel (0) target = $region29
    $region28: #{tpu_custom_call.1} parent=1 // pred_region
      _
    $region29: #{tpu_custom_call.1} parent=1 // pred_fallthru
      _
    // Predicated region
    $region30: #{tpu_custom_call.1} parent=1 // pred_check
      _
    $region31: #{tpu_custom_call.1} parent=1 // pred_check_branch
      %32 = sbr.rel (0) target = $region33
    $region32: #{tpu_custom_call.1} parent=1 // pred_region
      _
    $region33: #{tpu_custom_call.1} parent=1 // pred_fallthru
      _
    // Predicated region
    $region34: #{tpu_custom_call.1} parent=1 // pred_check
      _
    $region35: #{tpu_custom_call.1} parent=1 // pred_check_branch
      %34 = sbr.rel (0) target = $region37
    $region36: #{tpu_custom_call.1} parent=1 // pred_region
      _
    $region37: #{tpu_custom_call.1} parent=1 // pred_fallthru
      _
    // Predicated region
    $region38: #{tpu_custom_call.1} parent=1 // pred_check
      _
    $region39: #{tpu_custom_call.1} parent=1 // pred_check_branch
      %36 = sbr.rel (0) target = $region41
    $region40: #{tpu_custom_call.1} parent=1 // pred_region
      _
    $region41: #{tpu_custom_call.1} parent=1 // pred_fallthru
      _
    // Predicated region
    $region42: #{tpu_custom_call.1} parent=1 // pred_check
      _
    $region43: #{tpu_custom_call.1} parent=1 // pred_check_branch
      %38 = sbr.rel (0) target = $region45
    $region44: #{tpu_custom_call.1} parent=1 // pred_region
      _
    $region45: #{tpu_custom_call.1} parent=1 // pred_fallthru
      _
    %v39 = vld [vmem:[%s0] sm:$0xff]
    %v40 = vld [vmem:[%s0 + $0x8] sm:$0xff]
    %v41 = vld [vmem:[%s1] sm:$0xff]
    %v42 = vld [vmem:[%s1 + $0x8] sm:$0xff]
    %v43 = vld [vmem:[%s2] sm:$0xff]
    %v44 = vld [vmem:[%s2 + $0x8] sm:$0xff]
    %v45 = vld [vmem:[%s3] sm:$0xff]
    %v46 = vld [vmem:[%s3 + $0x8] sm:$0xff]
    %v47 = vld [vmem:[%s4] sm:$0xff]
    %v48 = vld [vmem:[%s4 + $0x8] sm:$0xff]
    %v49 = vld [vmem:[%s4 + $0x10] sm:$0xff]
    %v50 = vld [vmem:[%s4 + $0x18] sm:$0xff]
    %vm51 = vcmask 261120
    %v53 = vsel %vm51, %v41, 0
    %v56 = vsel %vm51, %v42, 0
    %58 = vmatprep.subr.mxu0 0.0
    %59 = vmatpush1.msra.mxu0 0.0
    %60 = vmatprep.subr.mxu0 0.0
    %61 = vmatpush1.msra.mxu0 0.0
    %62 = vmatprep.subr.mxu0 0.0
    %63 = vmatpush1.msra.mxu0 0.0
    %64 = vmatprep.subr.mxu0 0.0
    %65 = vmatpush1.msra.mxu0 0.0
    %66 = vmatprep.subr.mxu0 0.0
    %67 = vmatpush1.msra.mxu0 0.0
    %68 = vmatprep.subr.mxu0 0.0
    %69 = vmatpush1.msra.mxu0 0.0
    %70 = vmatprep.subr.mxu0 0.0
    %71 = vmatpush1.msra.mxu0 0.0
    %72 = vmatprep.subr.mxu0 0.0
    %73 = vmatpush1.msra.mxu0 0.0
    %74 = vmatprep.subr.mxu0 0.0
    %75 = vmatpush1.msra.mxu0 0.0
    %76 = vmatprep.subr.mxu0 0.0
    %77 = vmatpush1.msra.mxu0 0.0
    %78 = vmatprep.subr.mxu0 0.0
    %79 = vmatpush1.msra.mxu0 0.0
    %80 = vmatprep.subr.mxu0 0.0
    %81 = vmatpush1.msra.mxu0 0.0
    %82 = vmatprep.subr.mxu0 0.0
    %83 = vmatpush1.msra.mxu0 %v50
    %84 = vmatprep.subr.mxu0 0.0
    %85 = vmatpush1.msra.mxu0 %v49
    %86 = vmatprep.subr.mxu0 0.0
    %87 = vmatpush1.msra.mxu0 %v48
    %88 = vmatprep.subr.mxu0 0.0
    %89 = vmatpush1.msra.mxu0 %v47
    %90 = vmatprep.subr.mxu0 0.0
    %91 = vmatpush2.msra.mxu0 0.0
    %92 = vmatprep.subr.mxu0 0.0
    %93 = vmatpush2.msra.mxu0 0.0
    %94 = vmatprep.subr.mxu0 0.0
    %95 = vmatpush2.msra.mxu0 0.0
    %96 = vmatprep.subr.mxu0 0.0
    %97 = vmatpush2.msra.mxu0 0.0
    %98 = vmatprep.subr.mxu0 0.0
    %99 = vmatpush2.msra.mxu0 0.0
    %100 = vmatprep.subr.mxu0 0.0
    %101 = vmatpush2.msra.mxu0 0.0
    %102 = vmatprep.subr.mxu0 0.0
    %103 = vmatpush2.msra.mxu0 0.0
    %104 = vmatprep.subr.mxu0 0.0
    %105 = vmatpush2.msra.mxu0 0.0
    %106 = vmatprep.subr.mxu0 0.0
    %107 = vmatpush2.msra.mxu0 0.0
    %108 = vmatprep.subr.mxu0 0.0
    %109 = vmatpush2.msra.mxu0 0.0
    %110 = vmatprep.subr.mxu0 0.0
    %111 = vmatpush2.msra.mxu0 0.0
    %112 = vmatprep.subr.mxu0 0.0
    %113 = vmatpush2.msra.mxu0 0.0
    %114 = vmatprep.subr.mxu0 0.0
    %115 = vmatpush2.msra.mxu0 0.0
    %116 = vmatprep.subr.mxu0 0.0
    %117 = vmatpush2.msra.mxu0 0.0
    %118 = vmatprep.subr.mxu0 0.0
    %119 = vmatpush2.msra.mxu0 0.0
    %120 = vmatprep.subr.mxu0 0.0
    %121 = vmatpush2.msra.mxu0 0.0
    %122 = vmatprep.mubr.f32.mxu0 0.0
    %123 = vmatmul.mubr.f32.gmra.mxu0 %v53
    %v124 = vpop.f32.mrf.mxu0
    %v125 = vadd.f32 0.0, %v124
    %v126 = vpop.f32.mrf.mxu0
    %127 = vmatprep.mubr.f32.mxu0 0.0
    %128 = vmatmul.mubr.f32.gmra.mxu0 %v56
    %v129 = vpop.f32.mrf.mxu0
    %v130 = vadd.f32 0.0, %v129
    %v131 = vpop.f32.mrf.mxu0
    %132 = vdwg.mxu0
    %v133 = vmul.f32 %v125, %v43
    %v134 = vmul.f32 %v130, %v44
    %v135 = vld [vmem:[%s5] sm:$0xff]
    %v136 = vld [vmem:[%s5 + $0x8] sm:$0xff]
    %v137 = vld [vmem:[%s5 + $0x10] sm:$0xff]
    %v138 = vld [vmem:[%s5 + $0x18] sm:$0xff]
    %v139 = vld [vmem:[%s5 + $0x20] sm:$0xff]
    %v140 = vld [vmem:[%s5 + $0x28] sm:$0xff]
    %v141 = vld [vmem:[%s5 + $0x30] sm:$0xff]
    %v142 = vld [vmem:[%s5 + $0x38] sm:$0xff]
    %v143 = vld [vmem:[%s5 + $0x40] sm:$0xff]
    %v144 = vld [vmem:[%s5 + $0x48] sm:$0xff]
    %v145 = vld [vmem:[%s5 + $0x50] sm:$0xff]
    %v146 = vld [vmem:[%s5 + $0x58] sm:$0xff]
    %v147 = vld [vmem:[%s5 + $0x60] sm:$0xff]
    %v148 = vld [vmem:[%s5 + $0x68] sm:$0xff]
    %v149 = vld [vmem:[%s5 + $0x70] sm:$0xff]
    %v150 = vld [vmem:[%s5 + $0x78] sm:$0xff]
    %v151 = vld [vmem:[%s6] sm:$0xf]
    %vm152 = vcmask 31744
    %v154 = vsel %vm152, %v45, 0
    %v157 = vsel %vm152, %v46, 0
    %vm159 = vcmask 1043456
    %v161 = vsel %vm159, %v151, 0
    %163 = vmatprep.subr.mxu0 0.0
    %164 = vmatpush1.msra.mxu0 0.0
    %165 = vmatprep.subr.mxu0 0.0
    %166 = vmatpush1.msra.mxu0 0.0
    %167 = vmatprep.subr.mxu0 0.0
    %168 = vmatpush1.msra.mxu0 0.0
    %169 = vmatprep.subr.mxu0 0.0
    %170 = vmatpush1.msra.mxu0 0.0
    %171 = vmatprep.subr.mxu0 0.0
    %172 = vmatpush1.msra.mxu0 0.0
    %173 = vmatprep.subr.mxu0 0.0
    %174 = vmatpush1.msra.mxu0 0.0
    %175 = vmatprep.subr.mxu0 0.0
    %176 = vmatpush1.msra.mxu0 0.0
    %177 = vmatprep.subr.mxu0 0.0
    %178 = vmatpush1.msra.mxu0 0.0
    %179 = vmatprep.subr.mxu0 0.0
    %180 = vmatpush1.msra.mxu0 0.0
    %181 = vmatprep.subr.mxu0 0.0
    %182 = vmatpush1.msra.mxu0 0.0
    %183 = vmatprep.subr.mxu0 0.0
    %184 = vmatpush1.msra.mxu0 0.0
    %185 = vmatprep.subr.mxu0 0.0
    %186 = vmatpush1.msra.mxu0 0.0
    %187 = vmatprep.subr.mxu0 0.0
    %188 = vmatpush1.msra.mxu0 0.0
    %189 = vmatprep.subr.mxu0 0.0
    %190 = vmatpush1.msra.mxu0 0.0
    %191 = vmatprep.subr.mxu0 0.0
    %192 = vmatpush1.msra.mxu0 0.0
    %193 = vmatprep.subr.mxu0 0.0
    %194 = vmatpush1.msra.mxu0 %v161
    %195 = vmatprep.subr.mxu0 0.0
    %196 = vmatpush2.msra.mxu0 0.0
    %197 = vmatprep.subr.mxu0 0.0
    %198 = vmatpush2.msra.mxu0 0.0
    %199 = vmatprep.subr.mxu0 0.0
    %200 = vmatpush2.msra.mxu0 0.0
    %201 = vmatprep.subr.mxu0 0.0
    %202 = vmatpush2.msra.mxu0 0.0
    %203 = vmatprep.subr.mxu0 0.0
    %204 = vmatpush2.msra.mxu0 0.0
    %205 = vmatprep.subr.mxu0 0.0
    %206 = vmatpush2.msra.mxu0 0.0
    %207 = vmatprep.subr.mxu0 0.0
    %208 = vmatpush2.msra.mxu0 0.0
    %209 = vmatprep.subr.mxu0 0.0
    %210 = vmatpush2.msra.mxu0 0.0
    %211 = vmatprep.subr.mxu0 0.0
    %212 = vmatpush2.msra.mxu0 0.0
    %213 = vmatprep.subr.mxu0 0.0
    %214 = vmatpush2.msra.mxu0 0.0
    %215 = vmatprep.subr.mxu0 0.0
    %216 = vmatpush2.msra.mxu0 0.0
    %217 = vmatprep.subr.mxu0 0.0
    %218 = vmatpush2.msra.mxu0 0.0
    %219 = vmatprep.subr.mxu0 0.0
    %220 = vmatpush2.msra.mxu0 0.0
    %221 = vmatprep.subr.mxu0 0.0
    %222 = vmatpush2.msra.mxu0 0.0
    %223 = vmatprep.subr.mxu0 0.0
    %224 = vmatpush2.msra.mxu0 0.0
    %225 = vmatprep.subr.mxu0 0.0
    %226 = vmatpush2.msra.mxu0 0.0
    %227 = vmatprep.mubr.f32.mxu0 0.0
    %228 = vmatmul.mubr.f32.gmra.mxu0 %v154
    %v229 = vpop.f32.mrf.mxu0
    %v230 = vadd.f32 0.0, %v229
    %v231 = vpop.f32.mrf.mxu0
    %232 = vmatprep.mubr.f32.mxu0 0.0
    %233 = vmatmul.mubr.f32.gmra.mxu0 %v157
    %v234 = vpop.f32.mrf.mxu0
    %v235 = vadd.f32 0.0, %v234
    %v236 = vpop.f32.mrf.mxu0
    %237 = vdwg.mxu0
    %238 = vmatprep.subr.mxu0 0.0
    %239 = vmatpush1.msra.mxu0 %v150
    %240 = vmatprep.subr.mxu0 0.0
    %241 = vmatpush1.msra.mxu0 %v149
    %242 = vmatprep.subr.mxu0 0.0
    %243 = vmatpush1.msra.mxu0 %v148
    %244 = vmatprep.subr.mxu0 0.0
    %245 = vmatpush1.msra.mxu0 %v147
    %246 = vmatprep.subr.mxu0 0.0
    %247 = vmatpush1.msra.mxu0 %v146
    %248 = vmatprep.subr.mxu0 0.0
    %249 = vmatpush1.msra.mxu0 %v145
    %250 = vmatprep.subr.mxu0 0.0
    %251 = vmatpush1.msra.mxu0 %v144
    %252 = vmatprep.subr.mxu0 0.0
    %253 = vmatpush1.msra.mxu0 %v143
    %254 = vmatprep.subr.mxu0 0.0
    %255 = vmatpush1.msra.mxu0 %v142
    %256 = vmatprep.subr.mxu0 0.0
    %257 = vmatpush1.msra.mxu0 %v141
    %258 = vmatprep.subr.mxu0 0.0
    %259 = vmatpush1.msra.mxu0 %v140
    %260 = vmatprep.subr.mxu0 0.0
    %261 = vmatpush1.msra.mxu0 %v139
    %262 = vmatprep.subr.mxu0 0.0
    %263 = vmatpush1.msra.mxu0 %v138
    %264 = vmatprep.subr.mxu0 0.0
    %265 = vmatpush1.msra.mxu0 %v137
    %266 = vmatprep.subr.mxu0 0.0
    %267 = vmatpush1.msra.mxu0 %v136
    %268 = vmatprep.subr.mxu0 0.0
    %269 = vmatpush1.msra.mxu0 %v135
    %270 = vmatprep.subr.mxu0 0.0
    %271 = vmatpush2.msra.mxu0 0.0
    %272 = vmatprep.subr.mxu0 0.0
    %273 = vmatpush2.msra.mxu0 0.0
    %274 = vmatprep.subr.mxu0 0.0
    %275 = vmatpush2.msra.mxu0 0.0
    %276 = vmatprep.subr.mxu0 0.0
    %277 = vmatpush2.msra.mxu0 0.0
    %278 = vmatprep.subr.mxu0 0.0
    %279 = vmatpush2.msra.mxu0 0.0
    %280 = vmatprep.subr.mxu0 0.0
    %281 = vmatpush2.msra.mxu0 0.0
    %282 = vmatprep.subr.mxu0 0.0
    %283 = vmatpush2.msra.mxu0 0.0
    %284 = vmatprep.subr.mxu0 0.0
    %285 = vmatpush2.msra.mxu0 0.0
    %286 = vmatprep.subr.mxu0 0.0
    %287 = vmatpush2.msra.mxu0 0.0
    %288 = vmatprep.subr.mxu0 0.0
    %289 = vmatpush2.msra.mxu0 0.0
    %290 = vmatprep.subr.mxu0 0.0
    %291 = vmatpush2.msra.mxu0 0.0
    %292 = vmatprep.subr.mxu0 0.0
    %293 = vmatpush2.msra.mxu0 0.0
    %294 = vmatprep.subr.mxu0 0.0
    %295 = vmatpush2.msra.mxu0 0.0
    %296 = vmatprep.subr.mxu0 0.0
    %297 = vmatpush2.msra.mxu0 0.0
    %298 = vmatprep.subr.mxu0 0.0
    %299 = vmatpush2.msra.mxu0 0.0
    %300 = vmatprep.subr.mxu0 0.0
    %301 = vmatpush2.msra.mxu0 0.0
    %302 = vmatprep.mubr.f32.mxu0 0.0
    %303 = vmatmul.mubr.f32.gmra.mxu0 %v133
    %v304 = vpop.f32.mrf.mxu0
    %v305 = vadd.f32 %v230, %v304
    %v306 = vpop.f32.mrf.mxu0
    %307 = vmatprep.mubr.f32.mxu0 0.0
    %308 = vmatmul.mubr.f32.gmra.mxu0 %v134
    %v309 = vpop.f32.mrf.mxu0
    %v310 = vadd.f32 %v235, %v309
    %v311 = vpop.f32.mrf.mxu0
    %312 = vdwg.mxu0
    %vm313 = vcmp.ge.f32.partialorder %v305, 0.0
    %vm314 = vcmp.ge.f32.partialorder %v310, 0.0
    %v315 = vmul.f32 %v305, 0.2
    %v316 = vmul.f32 %v310, 0.2
    %v317 = vsel %vm313, %v305, %v315
    %v318 = vsel %vm314, %v310, %v316
    %v319 = vld [vmem:[%s7] sm:$0xff]
    %v320 = vld [vmem:[%s7 + $0x8] sm:$0xff]
    %v321 = vld [vmem:[%s7 + $0x10] sm:$0xff]
    %v322 = vld [vmem:[%s7 + $0x18] sm:$0xff]
    %v323 = vld [vmem:[%s7 + $0x20] sm:$0xff]
    %v324 = vld [vmem:[%s7 + $0x28] sm:$0xff]
    %v325 = vld [vmem:[%s7 + $0x30] sm:$0xff]
    %v326 = vld [vmem:[%s7 + $0x38] sm:$0xff]
    %v327 = vld [vmem:[%s7 + $0x40] sm:$0xff]
    %v328 = vld [vmem:[%s7 + $0x48] sm:$0xff]
    %v329 = vld [vmem:[%s7 + $0x50] sm:$0xff]
    %v330 = vld [vmem:[%s7 + $0x58] sm:$0xff]
    %v331 = vld [vmem:[%s7 + $0x60] sm:$0xff]
    %v332 = vld [vmem:[%s7 + $0x68] sm:$0xff]
    %v333 = vld [vmem:[%s7 + $0x70] sm:$0xff]
    %v334 = vld [vmem:[%s7 + $0x78] sm:$0xff]
    %335 = vmatprep.subr.mxu0 0.0
    %336 = vmatpush1.msra.mxu0 %v334
    %337 = vmatprep.subr.mxu0 0.0
    %338 = vmatpush1.msra.mxu0 %v333
    %339 = vmatprep.subr.mxu0 0.0
    %340 = vmatpush1.msra.mxu0 %v332
    %341 = vmatprep.subr.mxu0 0.0
    %342 = vmatpush1.msra.mxu0 %v331
    %343 = vmatprep.subr.mxu0 0.0
    %344 = vmatpush1.msra.mxu0 %v330
    %345 = vmatprep.subr.mxu0 0.0
    %346 = vmatpush1.msra.mxu0 %v329
    %347 = vmatprep.subr.mxu0 0.0
    %348 = vmatpush1.msra.mxu0 %v328
    %349 = vmatprep.subr.mxu0 0.0
    %350 = vmatpush1.msra.mxu0 %v327
    %351 = vmatprep.subr.mxu0 0.0
    %352 = vmatpush1.msra.mxu0 %v326
    %353 = vmatprep.subr.mxu0 0.0
    %354 = vmatpush1.msra.mxu0 %v325
    %355 = vmatprep.subr.mxu0 0.0
    %356 = vmatpush1.msra.mxu0 %v324
    %357 = vmatprep.subr.mxu0 0.0
    %358 = vmatpush1.msra.mxu0 %v323
    %359 = vmatprep.subr.mxu0 0.0
    %360 = vmatpush1.msra.mxu0 %v322
    %361 = vmatprep.subr.mxu0 0.0
    %362 = vmatpush1.msra.mxu0 %v321
    %363 = vmatprep.subr.mxu0 0.0
    %364 = vmatpush1.msra.mxu0 %v320
    %365 = vmatprep.subr.mxu0 0.0
    %366 = vmatpush1.msra.mxu0 %v319
    %367 = vmatprep.subr.mxu0 0.0
    %368 = vmatpush2.msra.mxu0 0.0
    %369 = vmatprep.subr.mxu0 0.0
    %370 = vmatpush2.msra.mxu0 0.0
    %371 = vmatprep.subr.mxu0 0.0
    %372 = vmatpush2.msra.mxu0 0.0
    %373 = vmatprep.subr.mxu0 0.0
    %374 = vmatpush2.msra.mxu0 0.0
    %375 = vmatprep.subr.mxu0 0.0
    %376 = vmatpush2.msra.mxu0 0.0
    %377 = vmatprep.subr.mxu0 0.0
    %378 = vmatpush2.msra.mxu0 0.0
    %379 = vmatprep.subr.mxu0 0.0
    %380 = vmatpush2.msra.mxu0 0.0
    %381 = vmatprep.subr.mxu0 0.0
    %382 = vmatpush2.msra.mxu0 0.0
    %383 = vmatprep.subr.mxu0 0.0
    %384 = vmatpush2.msra.mxu0 0.0
    %385 = vmatprep.subr.mxu0 0.0
    %386 = vmatpush2.msra.mxu0 0.0
    %387 = vmatprep.subr.mxu0 0.0
    %388 = vmatpush2.msra.mxu0 0.0
    %389 = vmatprep.subr.mxu0 0.0
    %390 = vmatpush2.msra.mxu0 0.0
    %391 = vmatprep.subr.mxu0 0.0
    %392 = vmatpush2.msra.mxu0 0.0
    %393 = vmatprep.subr.mxu0 0.0
    %394 = vmatpush2.msra.mxu0 0.0
    %395 = vmatprep.subr.mxu0 0.0
    %396 = vmatpush2.msra.mxu0 0.0
    %397 = vmatprep.subr.mxu0 0.0
    %398 = vmatpush2.msra.mxu0 0.0
    %399 = vmatprep.mubr.f32.mxu0 0.0
    %400 = vmatmul.mubr.f32.gmra.mxu0 %v317
    %v401 = vpop.f32.mrf.mxu0
    %v402 = vadd.f32 0.0, %v401
    %v403 = vpop.f32.mrf.mxu0
    %404 = vmatprep.mubr.f32.mxu0 0.0
    %405 = vmatmul.mubr.f32.gmra.mxu0 %v318
    %v406 = vpop.f32.mrf.mxu0
    %v407 = vadd.f32 0.0, %v406
    %v408 = vpop.f32.mrf.mxu0
    %409 = vdwg.mxu0
    %v410 = vsel %vm152, %v402, -inf
    %411 = vmax.xlane.f32.xlu0 %v410
    %v412 = vpop.xlane.xlu0 %411
    %v413 = vsel %vm152, %v407, -inf
    %414 = vmax.xlane.f32.xlu0 %v413
    %v415 = vpop.xlane.xlu0 %414
    %v416 = vsub.f32 %v402, %v412
    %v417 = vsub.f32 %v407, %v415
    %v418 = vmul.f32 %v416, 1.442695
    %v419 = vpow.pop %v418
    %v420 = vmul.f32 %v417, 1.442695
    %v421 = vpow.pop %v420
    %v422 = vsel %vm152, %v419, 0.0
    %423 = vadd.xlane.f32.xlu0 %v422
    %v424 = vpop.xlane.xlu0 %423
    %v425 = vsel %vm152, %v421, 0.0
    %426 = vadd.xlane.f32.xlu0 %v425
    %v427 = vpop.xlane.xlu0 %426
    %v428 = vrcp.pop %v424
    %v429 = vrcp.pop %v427
    %v430 = vmul.f32 %v419, %v428
    %v431 = vmul.f32 %v421, %v429
    %v432 = vld [vmem:[%s8] sm:$0xf]
    %v434 = vsel %vm152, %v430, 0
    %v437 = vsel %vm152, %v431, 0
    %v440 = vsel %vm159, %v432, 0
    %442 = vmatprep.subr.mxu0 0.0
    %443 = vmatpush1.msra.mxu0 0.0
    %444 = vmatprep.subr.mxu0 0.0
    %445 = vmatpush1.msra.mxu0 0.0
    %446 = vmatprep.subr.mxu0 0.0
    %447 = vmatpush1.msra.mxu0 0.0
    %448 = vmatprep.subr.mxu0 0.0
    %449 = vmatpush1.msra.mxu0 0.0
    %450 = vmatprep.subr.mxu0 0.0
    %451 = vmatpush1.msra.mxu0 0.0
    %452 = vmatprep.subr.mxu0 0.0
    %453 = vmatpush1.msra.mxu0 0.0
    %454 = vmatprep.subr.mxu0 0.0
    %455 = vmatpush1.msra.mxu0 0.0
    %456 = vmatprep.subr.mxu0 0.0
    %457 = vmatpush1.msra.mxu0 0.0
    %458 = vmatprep.subr.mxu0 0.0
    %459 = vmatpush1.msra.mxu0 0.0
    %460 = vmatprep.subr.mxu0 0.0
    %461 = vmatpush1.msra.mxu0 0.0
    %462 = vmatprep.subr.mxu0 0.0
    %463 = vmatpush1.msra.mxu0 0.0
    %464 = vmatprep.subr.mxu0 0.0
    %465 = vmatpush1.msra.mxu0 0.0
    %466 = vmatprep.subr.mxu0 0.0
    %467 = vmatpush1.msra.mxu0 0.0
    %468 = vmatprep.subr.mxu0 0.0
    %469 = vmatpush1.msra.mxu0 0.0
    %470 = vmatprep.subr.mxu0 0.0
    %471 = vmatpush1.msra.mxu0 0.0
    %472 = vmatprep.subr.mxu0 0.0
    %473 = vmatpush1.msra.mxu0 %v440
    %474 = vmatprep.subr.mxu0 0.0
    %475 = vmatpush2.msra.mxu0 0.0
    %476 = vmatprep.subr.mxu0 0.0
    %477 = vmatpush2.msra.mxu0 0.0
    %478 = vmatprep.subr.mxu0 0.0
    %479 = vmatpush2.msra.mxu0 0.0
    %480 = vmatprep.subr.mxu0 0.0
    %481 = vmatpush2.msra.mxu0 0.0
    %482 = vmatprep.subr.mxu0 0.0
    %483 = vmatpush2.msra.mxu0 0.0
    %484 = vmatprep.subr.mxu0 0.0
    %485 = vmatpush2.msra.mxu0 0.0
    %486 = vmatprep.subr.mxu0 0.0
    %487 = vmatpush2.msra.mxu0 0.0
    %488 = vmatprep.subr.mxu0 0.0
    %489 = vmatpush2.msra.mxu0 0.0
    %490 = vmatprep.subr.mxu0 0.0
    %491 = vmatpush2.msra.mxu0 0.0
    %492 = vmatprep.subr.mxu0 0.0
    %493 = vmatpush2.msra.mxu0 0.0
    %494 = vmatprep.subr.mxu0 0.0
    %495 = vmatpush2.msra.mxu0 0.0
    %496 = vmatprep.subr.mxu0 0.0
    %497 = vmatpush2.msra.mxu0 0.0
    %498 = vmatprep.subr.mxu0 0.0
    %499 = vmatpush2.msra.mxu0 0.0
    %500 = vmatprep.subr.mxu0 0.0
    %501 = vmatpush2.msra.mxu0 0.0
    %502 = vmatprep.subr.mxu0 0.0
    %503 = vmatpush2.msra.mxu0 0.0
    %504 = vmatprep.subr.mxu0 0.0
    %505 = vmatpush2.msra.mxu0 0.0
    %506 = vmatprep.mubr.f32.mxu0 0.0
    %507 = vmatmul.mubr.f32.gmra.mxu0 %v434
    %v508 = vpop.f32.mrf.mxu0
    %v509 = vadd.f32 0.0, %v508
    %v510 = vpop.f32.mrf.mxu0
    %511 = vmatprep.mubr.f32.mxu0 0.0
    %512 = vmatmul.mubr.f32.gmra.mxu0 %v437
    %v513 = vpop.f32.mrf.mxu0
    %v514 = vadd.f32 0.0, %v513
    %v515 = vpop.f32.mrf.mxu0
    %516 = vdwg.mxu0
    %v517 = vld [vmem:[%s9] sm:$0xff]
    %v518 = vld [vmem:[%s9 + $0x8] sm:$0xff]
    %v519 = vld [vmem:[%s9 + $0x10] sm:$0xff]
    %v520 = vld [vmem:[%s9 + $0x18] sm:$0xff]
    %v521 = vmul.f32 %v509, %v43
    %v522 = vmul.f32 %v514, %v44
    %v523 = vld [vmem:[%s10] sm:$0xff]
    %v524 = vld [vmem:[%s10 + $0x8] sm:$0xff]
    %v525 = vld [vmem:[%s10 + $0x10] sm:$0xff]
    %v526 = vld [vmem:[%s10 + $0x18] sm:$0xff]
    %v527 = vld [vmem:[%s10 + $0x20] sm:$0xff]
    %v528 = vld [vmem:[%s10 + $0x28] sm:$0xff]
    %v529 = vld [vmem:[%s10 + $0x30] sm:$0xff]
    %v530 = vld [vmem:[%s10 + $0x38] sm:$0xff]
    %v531 = vld [vmem:[%s10 + $0x40] sm:$0xff]
    %v532 = vld [vmem:[%s10 + $0x48] sm:$0xff]
    %v533 = vld [vmem:[%s10 + $0x50] sm:$0xff]
    %v534 = vld [vmem:[%s10 + $0x58] sm:$0xff]
    %v535 = vld [vmem:[%s10 + $0x60] sm:$0xff]
    %v536 = vld [vmem:[%s10 + $0x68] sm:$0xff]
    %v537 = vld [vmem:[%s10 + $0x70] sm:$0xff]
    %v538 = vld [vmem:[%s10 + $0x78] sm:$0xff]
    %539 = vmatprep.subr.mxu0 0.0
    %540 = vmatpush1.msra.mxu0 %v538
    %541 = vmatprep.subr.mxu0 0.0
    %542 = vmatpush1.msra.mxu0 %v537
    %543 = vmatprep.subr.mxu0 0.0
    %544 = vmatpush1.msra.mxu0 %v536
    %545 = vmatprep.subr.mxu0 0.0
    %546 = vmatpush1.msra.mxu0 %v535
    %547 = vmatprep.subr.mxu0 0.0
    %548 = vmatpush1.msra.mxu0 %v534
    %549 = vmatprep.subr.mxu0 0.0
    %550 = vmatpush1.msra.mxu0 %v533
    %551 = vmatprep.subr.mxu0 0.0
    %552 = vmatpush1.msra.mxu0 %v532
    %553 = vmatprep.subr.mxu0 0.0
    %554 = vmatpush1.msra.mxu0 %v531
    %555 = vmatprep.subr.mxu0 0.0
    %556 = vmatpush1.msra.mxu0 %v530
    %557 = vmatprep.subr.mxu0 0.0
    %558 = vmatpush1.msra.mxu0 %v529
    %559 = vmatprep.subr.mxu0 0.0
    %560 = vmatpush1.msra.mxu0 %v528
    %561 = vmatprep.subr.mxu0 0.0
    %562 = vmatpush1.msra.mxu0 %v527
    %563 = vmatprep.subr.mxu0 0.0
    %564 = vmatpush1.msra.mxu0 %v526
    %565 = vmatprep.subr.mxu0 0.0
    %566 = vmatpush1.msra.mxu0 %v525
    %567 = vmatprep.subr.mxu0 0.0
    %568 = vmatpush1.msra.mxu0 %v524
    %569 = vmatprep.subr.mxu0 0.0
    %570 = vmatpush1.msra.mxu0 %v523
    %571 = vmatprep.subr.mxu0 0.0
    %572 = vmatpush2.msra.mxu0 0.0
    %573 = vmatprep.subr.mxu0 0.0
    %574 = vmatpush2.msra.mxu0 0.0
    %575 = vmatprep.subr.mxu0 0.0
    %576 = vmatpush2.msra.mxu0 0.0
    %577 = vmatprep.subr.mxu0 0.0
    %578 = vmatpush2.msra.mxu0 0.0
    %579 = vmatprep.subr.mxu0 0.0
    %580 = vmatpush2.msra.mxu0 0.0
    %581 = vmatprep.subr.mxu0 0.0
    %582 = vmatpush2.msra.mxu0 0.0
    %583 = vmatprep.subr.mxu0 0.0
    %584 = vmatpush2.msra.mxu0 0.0
    %585 = vmatprep.subr.mxu0 0.0
    %586 = vmatpush2.msra.mxu0 0.0
    %587 = vmatprep.subr.mxu0 0.0
    %588 = vmatpush2.msra.mxu0 0.0
    %589 = vmatprep.subr.mxu0 0.0
    %590 = vmatpush2.msra.mxu0 0.0
    %591 = vmatprep.subr.mxu0 0.0
    %592 = vmatpush2.msra.mxu0 0.0
    %593 = vmatprep.subr.mxu0 0.0
    %594 = vmatpush2.msra.mxu0 0.0
    %595 = vmatprep.subr.mxu0 0.0
    %596 = vmatpush2.msra.mxu0 0.0
    %597 = vmatprep.subr.mxu0 0.0
    %598 = vmatpush2.msra.mxu0 0.0
    %599 = vmatprep.subr.mxu0 0.0
    %600 = vmatpush2.msra.mxu0 0.0
    %601 = vmatprep.subr.mxu0 0.0
    %602 = vmatpush2.msra.mxu0 0.0
    %603 = vmatprep.mubr.f32.mxu0 0.0
    %604 = vmatmul.mubr.f32.gmra.mxu0 %v521
    %v605 = vpop.f32.mrf.mxu0
    %v606 = vadd.f32 0.0, %v605
    %v607 = vpop.f32.mrf.mxu0
    %608 = vmatprep.mubr.f32.mxu0 0.0
    %609 = vmatmul.mubr.f32.gmra.mxu0 %v522
    %v610 = vpop.f32.mrf.mxu0
    %v611 = vadd.f32 0.0, %v610
    %v612 = vpop.f32.mrf.mxu0
    %613 = vdwg.mxu0
    %v615 = vsel %vm51, %v39, 0
    %v618 = vsel %vm51, %v40, 0
    %620 = vmatprep.subr.mxu0 0.0
    %621 = vmatpush1.msra.mxu0 0.0
    %622 = vmatprep.subr.mxu0 0.0
    %623 = vmatpush1.msra.mxu0 0.0
    %624 = vmatprep.subr.mxu0 0.0
    %625 = vmatpush1.msra.mxu0 0.0
    %626 = vmatprep.subr.mxu0 0.0
    %627 = vmatpush1.msra.mxu0 0.0
    %628 = vmatprep.subr.mxu0 0.0
    %629 = vmatpush1.msra.mxu0 0.0
    %630 = vmatprep.subr.mxu0 0.0
    %631 = vmatpush1.msra.mxu0 0.0
    %632 = vmatprep.subr.mxu0 0.0
    %633 = vmatpush1.msra.mxu0 0.0
    %634 = vmatprep.subr.mxu0 0.0
    %635 = vmatpush1.msra.mxu0 0.0
    %636 = vmatprep.subr.mxu0 0.0
    %637 = vmatpush1.msra.mxu0 0.0
    %638 = vmatprep.subr.mxu0 0.0
    %639 = vmatpush1.msra.mxu0 0.0
    %640 = vmatprep.subr.mxu0 0.0
    %641 = vmatpush1.msra.mxu0 0.0
    %642 = vmatprep.subr.mxu0 0.0
    %643 = vmatpush1.msra.mxu0 0.0
    %644 = vmatprep.subr.mxu0 0.0
    %645 = vmatpush1.msra.mxu0 %v520
    %646 = vmatprep.subr.mxu0 0.0
    %647 = vmatpush1.msra.mxu0 %v519
    %648 = vmatprep.subr.mxu0 0.0
    %649 = vmatpush1.msra.mxu0 %v518
    %650 = vmatprep.subr.mxu0 0.0
    %651 = vmatpush1.msra.mxu0 %v517
    %652 = vmatprep.subr.mxu0 0.0
    %653 = vmatpush2.msra.mxu0 0.0
    %654 = vmatprep.subr.mxu0 0.0
    %655 = vmatpush2.msra.mxu0 0.0
    %656 = vmatprep.subr.mxu0 0.0
    %657 = vmatpush2.msra.mxu0 0.0
    %658 = vmatprep.subr.mxu0 0.0
    %659 = vmatpush2.msra.mxu0 0.0
    %660 = vmatprep.subr.mxu0 0.0
    %661 = vmatpush2.msra.mxu0 0.0
    %662 = vmatprep.subr.mxu0 0.0
    %663 = vmatpush2.msra.mxu0 0.0
    %664 = vmatprep.subr.mxu0 0.0
    %665 = vmatpush2.msra.mxu0 0.0
    %666 = vmatprep.subr.mxu0 0.0
    %667 = vmatpush2.msra.mxu0 0.0
    %668 = vmatprep.subr.mxu0 0.0
    %669 = vmatpush2.msra.mxu0 0.0
    %670 = vmatprep.subr.mxu0 0.0
    %671 = vmatpush2.msra.mxu0 0.0
    %672 = vmatprep.subr.mxu0 0.0
    %673 = vmatpush2.msra.mxu0 0.0
    %674 = vmatprep.subr.mxu0 0.0
    %675 = vmatpush2.msra.mxu0 0.0
    %676 = vmatprep.subr.mxu0 0.0
    %677 = vmatpush2.msra.mxu0 0.0
    %678 = vmatprep.subr.mxu0 0.0
    %679 = vmatpush2.msra.mxu0 0.0
    %680 = vmatprep.subr.mxu0 0.0
    %681 = vmatpush2.msra.mxu0 0.0
    %682 = vmatprep.subr.mxu0 0.0
    %683 = vmatpush2.msra.mxu0 0.0
    %684 = vmatprep.mubr.f32.mxu0 0.0
    %685 = vmatmul.mubr.f32.gmra.mxu0 %v615
    %v686 = vpop.f32.mrf.mxu0
    %v687 = vadd.f32 %v606, %v686
    %v688 = vpop.f32.mrf.mxu0
    %689 = vmatprep.mubr.f32.mxu0 0.0
    %690 = vmatmul.mubr.f32.gmra.mxu0 %v618
    %v691 = vpop.f32.mrf.mxu0
    %v692 = vadd.f32 %v611, %v691
    %v693 = vpop.f32.mrf.mxu0
    %694 = vdwg.mxu0
    %v695 = vmax.f32 %v687, 0.0
    %v696 = vmax.f32 %v692, 0.0
    %697 = vst.msk [vmem:[#allocation2] sm:$0xff] %vm51, %v695
    %698 = vst.msk [vmem:[#allocation2 + $0x8] sm:$0xff] %vm51, %v696
    // Predicated region
    $region46: #{tpu_custom_call.1} parent=1 // pred_check
      _
    $region47: #{tpu_custom_call.1} parent=1 // pred_check_branch
      %700 = sbr.rel (0) target = $region49
    $region48: #{tpu_custom_call.1} parent=1 // pred_region
      %s702 = ssub.s32 256, 256
      %703 = vsyncadd [#allocation3], %s702
      %s704 = sshll.u32 [#allocation2], 4
      %s705 = int_to_ptr.vmem [resolvable:$true] %s704
      %710 = dma.vmem_to_hbm [thread:$0]  %s705, 256, %s11, [#allocation3], 128, 128, 8
    $region49: #{tpu_custom_call.1} parent=1 // pred_fallthru
      _
    // Predicated region
    $region50: #{tpu_custom_call.1} parent=1 // pred_check
      _
    $region51: #{tpu_custom_call.1} parent=1 // pred_check_branch
      %712 = sbr.rel (0) target = $region53
    $region52: #{tpu_custom_call.1} parent=1 // pred_region
      %713 = dma.done [#allocation3], 256
    $region53: #{tpu_custom_call.1} parent=1 // pred_fallthru
      _
    %714 = vsyncpa [#allocation3], 1

</llo_original>
